<compile_context>
chip_gen: v5e
topology: v5e:2x2
jax: 0.10.0
libtpu: 0.0.40
codegen_flags: <defaults>
</compile_context>

<pallas_src>
import jax
import jax.numpy as jnp
from jax.experimental import pallas as pl
from jax.experimental.pallas import tpu as pltpu


def linear_kernel(x_ref, w_ref, b_ref, o_ref):
    # x: (B, H), w: (H, N_pad) pre-transposed, b: (1, N_pad), o: (B, N_pad).
    # Plain MXU matmul, f32 accumulation, no in-kernel transpose.
    acc = jnp.dot(x_ref[...], w_ref[...], preferred_element_type=jnp.float32)
    o_ref[...] = (acc + b_ref[...]).astype(o_ref.dtype)


def pad_params(weight, bias, n_pad):
    """One-time parameter prep (module-init time, not per-call).

    weight: (N, H) PyTorch layout, bias: (N,).
    Returns w_pad: (H, n_pad) pre-transposed + zero-padded, b_pad: (1, n_pad).
    """
    N, H = weight.shape
    w_pad = jnp.zeros((H, n_pad), weight.dtype).at[:, :N].set(weight.T)
    b_pad = jnp.zeros((1, n_pad), bias.dtype).at[0, :N].set(bias)
    return w_pad, b_pad


def answer_predictor(x, w_pad, b_pad):
    """x: (B, H) f32; w_pad: (H, N_pad) f32; b_pad: (1, N_pad) f32.

    Returns PADDED logits (B, N_pad).  Columns >= num_classes are exactly 0;
    slice lazily downstream if the unpadded width is required.
    """
    B, H = x.shape
    N_pad = w_pad.shape[1]

    cost = pl.CostEstimate(
        flops=2 * B * H * N_pad,
        transcendentals=0,
        bytes_accessed=4 * (B * H + H * N_pad + N_pad + B * N_pad))

    out = pl.pallas_call(
        linear_kernel,
        out_shape=jax.ShapeDtypeStruct((B, N_pad), x.dtype),
        grid_spec=pl.GridSpec(
            grid=(1,),  # single shot: whole problem fits trivially in VMEM
            in_specs=[
                pl.BlockSpec((B, H), lambda i: (0, 0)),        # activations
                pl.BlockSpec((H, N_pad), lambda i: (0, 0)),    # pre-transposed weight
                pl.BlockSpec((1, N_pad), lambda i: (0, 0)),    # bias
            ],
            out_specs=pl.BlockSpec((B, N_pad), lambda i: (0, 0)),
        ),
        cost_estimate=cost,
    )(x, w_pad, b_pad)

    return out


if __name__ == "__main__":
    hidden_dim = 32
    num_classes = 1000
    batch = 8
    N_PAD = 1024  # next multiple of 128 >= num_classes

    key = jax.random.PRNGKey(0)
    kx, kw, kb = jax.random.split(key, 3)

    # Deterministic synthetic parameters (nn.Linear(hidden_dim, num_classes) shapes)
    x = jax.random.normal(kx, (batch, hidden_dim), dtype=jnp.float32)
    weight = jax.random.normal(kw, (num_classes, hidden_dim), dtype=jnp.float32) * 0.02
    bias = jax.random.normal(kb, (num_classes,), dtype=jnp.float32) * 0.01

    # One-time padding + transpose (parameter init), not on the per-call path.
    w_pad, b_pad = jax.block_until_ready(pad_params(weight, bias, N_PAD))

    out_padded = answer_predictor(x, w_pad, b_pad)
    jax.block_until_ready(out_padded)

    # Slice to the module's (B, num_classes) only for the correctness check
    # (outside the hot path; padded cols 1000..1023 are exactly zero).
    out = out_padded[:, :num_classes]

    # Reference check against plain JAX (PyTorch nn.Linear semantics).
    ref = x @ weight.T + bias
    assert out.shape == (batch, num_classes)
    assert jnp.allclose(out, ref, atol=1e-4, rtol=1e-4)
    assert jnp.all(out_padded[:, num_classes:] == 0)

    print("KERNEL_OK")
</pallas_src>

<mosaic_0001>
module attributes {stable_mosaic.version = 11 : i64} {
  func.func @linear_kernel(%arg0: i32, %arg1: memref<8x32xf32, #tpu.memory_space<vmem>>, %arg2: memref<32x1024xf32, #tpu.memory_space<vmem>>, %arg3: memref<1x1024xf32, #tpu.memory_space<vmem>>, %arg4: memref<8x1024xf32, #tpu.memory_space<vmem>>) attributes {dimension_semantics = [#tpu.dimension_semantics<arbitrary>], iteration_bounds = array<i64: 1>, scalar_prefetch = 0 : i64, scratch_operands = 0 : i64, tpu.core_type = #tpu.core_type<tc>, window_params = [{pipeline_mode = #tpu.pipeline_mode<synchronous>, transform_indices = @transform_0, window_bounds = array<i64: 8, 32>}, {pipeline_mode = #tpu.pipeline_mode<synchronous>, transform_indices = @transform_1, window_bounds = array<i64: 32, 1024>}, {pipeline_mode = #tpu.pipeline_mode<synchronous>, transform_indices = @transform_2, window_bounds = array<i64: 1, 1024>}, {pipeline_mode = #tpu.pipeline_mode<synchronous>, transform_indices = @transform_3, window_bounds = array<i64: 8, 1024>}]} {
    %c0 = arith.constant 0 : index
    %c0_0 = arith.constant 0 : index
    %0 = vector.load %arg1[%c0, %c0_0] : memref<8x32xf32, #tpu.memory_space<vmem>>, vector<8x32xf32>
    %c0_1 = arith.constant 0 : index
    %c0_2 = arith.constant 0 : index
    %1 = vector.load %arg2[%c0_1, %c0_2] : memref<32x1024xf32, #tpu.memory_space<vmem>>, vector<32x1024xf32>
    %cst = arith.constant dense<0.000000e+00> : vector<8x1024xf32>
    %2 = tpu.matmul %0, %1, %cst {dimension_numbers = #tpu.dot_dimension_numbers<[1], [0], [0], [1], [0, 0, 1, 1], [], []>} : vector<8x32xf32>, vector<32x1024xf32>, vector<8x1024xf32> -> vector<8x1024xf32>
    %c0_3 = arith.constant 0 : index
    %c0_4 = arith.constant 0 : index
    %3 = vector.load %arg3[%c0_3, %c0_4] : memref<1x1024xf32, #tpu.memory_space<vmem>>, vector<1x1024xf32>
    %4 = vector.broadcast %3 : vector<1x1024xf32> to vector<8x1024xf32>
    %5 = arith.addf %2, %4 : vector<8x1024xf32>
    %c0_5 = arith.constant 0 : index
    %c0_6 = arith.constant 0 : index
    %6 = vector.load %arg4[%c0_5, %c0_6] : memref<8x1024xf32, #tpu.memory_space<vmem>>, vector<8x1024xf32>
    tpu.vector_store %arg4[%c0_5, %c0_6], %5 {strides = array<i32>} : memref<8x1024xf32, #tpu.memory_space<vmem>>, vector<8x1024xf32>,
    return
  }
  func.func @transform_0(%arg0: i32) -> (i32, i32) {
    %c0_i32 = arith.constant 0 : i32
    %c0_i32_0 = arith.constant 0 : i32
    %c0_i32_1 = arith.constant 0 : i32
    return %c0_i32, %c0_i32_0 : i32, i32
  }
  func.func @transform_1(%arg0: i32) -> (i32, i32) {
    %c0_i32 = arith.constant 0 : i32
    %c0_i32_0 = arith.constant 0 : i32
    %c0_i32_1 = arith.constant 0 : i32
    return %c0_i32, %c0_i32_0 : i32, i32
  }
  func.func @transform_2(%arg0: i32) -> (i32, i32) {
    %c0_i32 = arith.constant 0 : i32
    %c0_i32_0 = arith.constant 0 : i32
    %c0_i32_1 = arith.constant 0 : i32
    return %c0_i32, %c0_i32_0 : i32, i32
  }
  func.func @transform_3(%arg0: i32) -> (i32, i32) {
    %c0_i32 = arith.constant 0 : i32
    %c0_i32_0 = arith.constant 0 : i32
    %c0_i32_1 = arith.constant 0 : i32
    return %c0_i32, %c0_i32_0 : i32, i32
  }
}

</mosaic_0001>

<llo_original>
// kernel: tpu_custom_call.1
$region0: #{tpu_custom_call.1}
  #allocation0 [shape = 'u32[]', space=smem, size = 0x4, offset = 0x4, fixed_abs, tag = 'smem constant byte address 0x4 - core index']
  #allocation1 [shape = 'u32[72,128]{1,0:T(1,128)}', space=vmem, size = 0x9000, scoped, tag = 'internal scratch']
  %s0 = inlined_call_operand.hbm [shape: f32[8,32], index: 0, kind: input, shape index: {}]
  %s1 = inlined_call_operand.hbm [shape: f32[32,1024], index: 1, kind: input, shape index: {}]
  %s2 = inlined_call_operand.hbm [shape: f32[1,1024], index: 2, kind: input, shape index: {}]
  %s3 = inlined_call_operand.hbm [shape: f32[8,1024], index: 3, kind: output, shape index: {}]
  %s4 = sld [smem:[#allocation0]]
  $region34: #{tpu_custom_call.1} parent=0
    _
  %s6 = ssub.s32 1, %s4
  %s7 = scalar_select 0, %s6, %s4
  $region1: #{tpu_custom_call.1} parent=0
    #allocation2 [shape = 'u8[4096]{0}', space=vmem, size = 0x1000, scoped, tag = 'input window, operand 0, single buffered']
    #allocation3 [shape = 's32[1]{0}', space=sflag, size = 0x4, scoped, tag = 'scoped memory for tpu_custom_call.1']
    #allocation4 [shape = 's32[1]{0}', space=sflag, size = 0x4, scoped, tag = 'scoped memory for tpu_custom_call.1']
    #allocation5 [shape = 'u8[131072]{0}', space=vmem, size = 0x20000, scoped, tag = 'input window, operand 1, single buffered']
    #allocation6 [shape = 's32[1]{0}', space=sflag, size = 0x4, scoped, tag = 'scoped memory for tpu_custom_call.1']
    #allocation7 [shape = 'u8[4096]{0}', space=vmem, size = 0x1000, scoped, tag = 'input window, operand 2, single buffered']
    #allocation8 [shape = 'u8[32768]{0}', space=vmem, size = 0x8000, scoped, tag = 'output window, operand 0, single buffered']
    %8 = vsyncpa [#allocation3], 0
    %9 = vsyncpa [#allocation6], 0
    %10 = vsyncpa [#allocation4], 0
    // Predicated region
    $region2: #{tpu_custom_call.1} parent=1 // pred_check
      _
    $region3: #{tpu_custom_call.1} parent=1 // pred_check_branch
      %12 = sbr.rel (0) target = $region5
    $region4: #{tpu_custom_call.1} parent=1 // pred_region
      %14 = vsyncadd [#allocation3], 0
      %s16 = sshll.u32 %s0, 4
      %s17 = int_to_ptr.hbm [resolvable:$true] %s16
      %s18 = sshll.u32 [#allocation2], 4
      %s19 = int_to_ptr.vmem [resolvable:$true] %s18
      %21 = dma.hbm_to_vmem [thread:$0]  %s17, 128, %s19, [#allocation3]
    $region5: #{tpu_custom_call.1} parent=1 // pred_fallthru
      _
    // Predicated region
    $region6: #{tpu_custom_call.1} parent=1 // pred_check
      _
    $region7: #{tpu_custom_call.1} parent=1 // pred_check_branch
      %23 = sbr.rel (0) target = $region9
    $region8: #{tpu_custom_call.1} parent=1 // pred_region
      %25 = vsyncadd [#allocation6], 0
      %s26 = sshll.u32 %s1, 4
      %s27 = int_to_ptr.hbm [resolvable:$true] %s26
      %s28 = sshll.u32 [#allocation5], 4
      %s29 = int_to_ptr.vmem [resolvable:$true] %s28
      %34 = dma.hbm_to_vmem [thread:$0]  %s27, 4096, %s29, [#allocation6], 1024, 1024, 64
    $region9: #{tpu_custom_call.1} parent=1 // pred_fallthru
      _
    // Predicated region
    $region10: #{tpu_custom_call.1} parent=1 // pred_check
      _
    $region11: #{tpu_custom_call.1} parent=1 // pred_check_branch
      %36 = sbr.rel (0) target = $region13
    $region12: #{tpu_custom_call.1} parent=1 // pred_region
      %38 = vsyncadd [#allocation6], 0
      %s40 = sshll.u32 %s2, 4
      %s41 = int_to_ptr.hbm [resolvable:$true] %s40
      %s42 = sshll.u32 [#allocation7], 4
      %s43 = int_to_ptr.vmem [resolvable:$true] %s42
      %45 = dma.hbm_to_vmem [thread:$0]  %s41, 128, %s43, [#allocation6]
    $region13: #{tpu_custom_call.1} parent=1 // pred_fallthru
      _
    // Predicated region
    $region14: #{tpu_custom_call.1} parent=1 // pred_check
      _
    $region15: #{tpu_custom_call.1} parent=1 // pred_check_branch
      %47 = sbr.rel (0) target = $region17
    $region16: #{tpu_custom_call.1} parent=1 // pred_region
      %49 = dma.done [#allocation3], 128
    $region17: #{tpu_custom_call.1} parent=1 // pred_fallthru
      _
    // Predicated region
    $region18: #{tpu_custom_call.1} parent=1 // pred_check
      _
    $region19: #{tpu_custom_call.1} parent=1 // pred_check_branch
      %51 = sbr.rel (0) target = $region21
    $region20: #{tpu_custom_call.1} parent=1 // pred_region
      %53 = dma.done [#allocation6], 4096
    $region21: #{tpu_custom_call.1} parent=1 // pred_fallthru
      _
    // Predicated region
    $region22: #{tpu_custom_call.1} parent=1 // pred_check
      _
    $region23: #{tpu_custom_call.1} parent=1 // pred_check_branch
      %55 = sbr.rel (0) target = $region25
    $region24: #{tpu_custom_call.1} parent=1 // pred_region
      %57 = dma.done [#allocation6], 128
    $region25: #{tpu_custom_call.1} parent=1 // pred_fallthru
      _
    %v58 = vld [vmem:[#allocation2] sm:$0xff]
    %v59 = vld [vmem:[#allocation5] sm:$0xff]
    %v60 = vld [vmem:[#allocation5 + $0x8] sm:$0xff]
    %v61 = vld [vmem:[#allocation5 + $0x10] sm:$0xff]
    %v62 = vld [vmem:[#allocation5 + $0x18] sm:$0xff]
    %v63 = vld [vmem:[#allocation5 + $0x20] sm:$0xff]
    %v64 = vld [vmem:[#allocation5 + $0x28] sm:$0xff]
    %v65 = vld [vmem:[#allocation5 + $0x30] sm:$0xff]
    %v66 = vld [vmem:[#allocation5 + $0x38] sm:$0xff]
    %v67 = vld [vmem:[#allocation5 + $0x40] sm:$0xff]
    %v68 = vld [vmem:[#allocation5 + $0x48] sm:$0xff]
    %v69 = vld [vmem:[#allocation5 + $0x50] sm:$0xff]
    %v70 = vld [vmem:[#allocation5 + $0x58] sm:$0xff]
    %v71 = vld [vmem:[#allocation5 + $0x60] sm:$0xff]
    %v72 = vld [vmem:[#allocation5 + $0x68] sm:$0xff]
    %v73 = vld [vmem:[#allocation5 + $0x70] sm:$0xff]
    %v74 = vld [vmem:[#allocation5 + $0x78] sm:$0xff]
    %v75 = vld [vmem:[#allocation5 + $0x80] sm:$0xff]
    %v76 = vld [vmem:[#allocation5 + $0x88] sm:$0xff]
    %v77 = vld [vmem:[#allocation5 + $0x90] sm:$0xff]
    %v78 = vld [vmem:[#allocation5 + $0x98] sm:$0xff]
    %v79 = vld [vmem:[#allocation5 + $0xa0] sm:$0xff]
    %v80 = vld [vmem:[#allocation5 + $0xa8] sm:$0xff]
    %v81 = vld [vmem:[#allocation5 + $0xb0] sm:$0xff]
    %v82 = vld [vmem:[#allocation5 + $0xb8] sm:$0xff]
    %v83 = vld [vmem:[#allocation5 + $0xc0] sm:$0xff]
    %v84 = vld [vmem:[#allocation5 + $0xc8] sm:$0xff]
    %v85 = vld [vmem:[#allocation5 + $0xd0] sm:$0xff]
    %v86 = vld [vmem:[#allocation5 + $0xd8] sm:$0xff]
    %v87 = vld [vmem:[#allocation5 + $0xe0] sm:$0xff]
    %v88 = vld [vmem:[#allocation5 + $0xe8] sm:$0xff]
    %v89 = vld [vmem:[#allocation5 + $0xf0] sm:$0xff]
    %v90 = vld [vmem:[#allocation5 + $0xf8] sm:$0xff]
    %v91 = vld [vmem:[#allocation7] sm:$0xff]
    %v93 = vperm.slane %v91, 0
    %v94 = vperm.slane %v91, 1
    %v95 = vperm.slane %v91, 2
    %v96 = vperm.slane %v91, 3
    %v97 = vperm.slane %v91, 4
    %v98 = vperm.slane %v91, 5
    %v99 = vperm.slane %v91, 6
    %v100 = vperm.slane %v91, 7
    %vm109 = vcmask 261120
    %v111 = vsel %vm109, %v58, 0
    %113 = vmatpush.msra.mxu0 0.0
    %114 = vmatpush.msra.mxu0 0.0
    %115 = vmatpush.msra.mxu0 0.0
    %116 = vmatpush.msra.mxu0 0.0
    %117 = vmatpush.msra.mxu0 0.0
    %118 = vmatpush.msra.mxu0 0.0
    %119 = vmatpush.msra.mxu0 0.0
    %120 = vmatpush.msra.mxu0 0.0
    %121 = vmatpush.msra.mxu0 0.0
    %122 = vmatpush.msra.mxu0 0.0
    %123 = vmatpush.msra.mxu0 0.0
    %124 = vmatpush.msra.mxu0 0.0
    %125 = vmatpush.msra.mxu0 %v83
    %126 = vmatpush.msra.mxu0 %v75
    %127 = vmatpush.msra.mxu0 %v67
    %128 = vmatpush.msra.mxu0 %v59
    %129 = vmatmul.f32.gmra.mxu0 %v111
    %v130 = vpop.f32.mrf.mxu0
    %v131 = vadd.f32 %v93, %v130
    %132 = vdwg.mxu0
    %133 = vmatpush.msra.mxu0 0.0
    %134 = vmatpush.msra.mxu0 0.0
    %135 = vmatpush.msra.mxu0 0.0
    %136 = vmatpush.msra.mxu0 0.0
    %137 = vmatpush.msra.mxu0 0.0
    %138 = vmatpush.msra.mxu0 0.0
    %139 = vmatpush.msra.mxu0 0.0
    %140 = vmatpush.msra.mxu0 0.0
    %141 = vmatpush.msra.mxu0 0.0
    %142 = vmatpush.msra.mxu0 0.0
    %143 = vmatpush.msra.mxu0 0.0
    %144 = vmatpush.msra.mxu0 0.0
    %145 = vmatpush.msra.mxu0 %v84
    %146 = vmatpush.msra.mxu0 %v76
    %147 = vmatpush.msra.mxu0 %v68
    %148 = vmatpush.msra.mxu0 %v60
    %149 = vmatmul.f32.gmra.mxu0 %v111
    %v150 = vpop.f32.mrf.mxu0
    %v151 = vadd.f32 %v94, %v150
    %152 = vdwg.mxu0
    %153 = vmatpush.msra.mxu0 0.0
    %154 = vmatpush.msra.mxu0 0.0
    %155 = vmatpush.msra.mxu0 0.0
    %156 = vmatpush.msra.mxu0 0.0
    %157 = vmatpush.msra.mxu0 0.0
    %158 = vmatpush.msra.mxu0 0.0
    %159 = vmatpush.msra.mxu0 0.0
    %160 = vmatpush.msra.mxu0 0.0
    %161 = vmatpush.msra.mxu0 0.0
    %162 = vmatpush.msra.mxu0 0.0
    %163 = vmatpush.msra.mxu0 0.0
    %164 = vmatpush.msra.mxu0 0.0
    %165 = vmatpush.msra.mxu0 %v85
    %166 = vmatpush.msra.mxu0 %v77
    %167 = vmatpush.msra.mxu0 %v69
    %168 = vmatpush.msra.mxu0 %v61
    %169 = vmatmul.f32.gmra.mxu0 %v111
    %v170 = vpop.f32.mrf.mxu0
    %v171 = vadd.f32 %v95, %v170
    %172 = vdwg.mxu0
    %173 = vmatpush.msra.mxu0 0.0
    %174 = vmatpush.msra.mxu0 0.0
    %175 = vmatpush.msra.mxu0 0.0
    %176 = vmatpush.msra.mxu0 0.0
    %177 = vmatpush.msra.mxu0 0.0
    %178 = vmatpush.msra.mxu0 0.0
    %179 = vmatpush.msra.mxu0 0.0
    %180 = vmatpush.msra.mxu0 0.0
    %181 = vmatpush.msra.mxu0 0.0
    %182 = vmatpush.msra.mxu0 0.0
    %183 = vmatpush.msra.mxu0 0.0
    %184 = vmatpush.msra.mxu0 0.0
    %185 = vmatpush.msra.mxu0 %v86
    %186 = vmatpush.msra.mxu0 %v78
    %187 = vmatpush.msra.mxu0 %v70
    %188 = vmatpush.msra.mxu0 %v62
    %189 = vmatmul.f32.gmra.mxu0 %v111
    %v190 = vpop.f32.mrf.mxu0
    %v191 = vadd.f32 %v96, %v190
    %192 = vdwg.mxu0
    %193 = vmatpush.msra.mxu0 0.0
    %194 = vmatpush.msra.mxu0 0.0
    %195 = vmatpush.msra.mxu0 0.0
    %196 = vmatpush.msra.mxu0 0.0
    %197 = vmatpush.msra.mxu0 0.0
    %198 = vmatpush.msra.mxu0 0.0
    %199 = vmatpush.msra.mxu0 0.0
    %200 = vmatpush.msra.mxu0 0.0
    %201 = vmatpush.msra.mxu0 0.0
    %202 = vmatpush.msra.mxu0 0.0
    %203 = vmatpush.msra.mxu0 0.0
    %204 = vmatpush.msra.mxu0 0.0
    %205 = vmatpush.msra.mxu0 %v87
    %206 = vmatpush.msra.mxu0 %v79
    %207 = vmatpush.msra.mxu0 %v71
    %208 = vmatpush.msra.mxu0 %v63
    %209 = vmatmul.f32.gmra.mxu0 %v111
    %v210 = vpop.f32.mrf.mxu0
    %v211 = vadd.f32 %v97, %v210
    %212 = vdwg.mxu0
    %213 = vmatpush.msra.mxu0 0.0
    %214 = vmatpush.msra.mxu0 0.0
    %215 = vmatpush.msra.mxu0 0.0
    %216 = vmatpush.msra.mxu0 0.0
    %217 = vmatpush.msra.mxu0 0.0
    %218 = vmatpush.msra.mxu0 0.0
    %219 = vmatpush.msra.mxu0 0.0
    %220 = vmatpush.msra.mxu0 0.0
    %221 = vmatpush.msra.mxu0 0.0
    %222 = vmatpush.msra.mxu0 0.0
    %223 = vmatpush.msra.mxu0 0.0
    %224 = vmatpush.msra.mxu0 0.0
    %225 = vmatpush.msra.mxu0 %v88
    %226 = vmatpush.msra.mxu0 %v80
    %227 = vmatpush.msra.mxu0 %v72
    %228 = vmatpush.msra.mxu0 %v64
    %229 = vmatmul.f32.gmra.mxu0 %v111
    %v230 = vpop.f32.mrf.mxu0
    %v231 = vadd.f32 %v98, %v230
    %232 = vdwg.mxu0
    %233 = vmatpush.msra.mxu0 0.0
    %234 = vmatpush.msra.mxu0 0.0
    %235 = vmatpush.msra.mxu0 0.0
    %236 = vmatpush.msra.mxu0 0.0
    %237 = vmatpush.msra.mxu0 0.0
    %238 = vmatpush.msra.mxu0 0.0
    %239 = vmatpush.msra.mxu0 0.0
    %240 = vmatpush.msra.mxu0 0.0
    %241 = vmatpush.msra.mxu0 0.0
    %242 = vmatpush.msra.mxu0 0.0
    %243 = vmatpush.msra.mxu0 0.0
    %244 = vmatpush.msra.mxu0 0.0
    %245 = vmatpush.msra.mxu0 %v89
    %246 = vmatpush.msra.mxu0 %v81
    %247 = vmatpush.msra.mxu0 %v73
    %248 = vmatpush.msra.mxu0 %v65
    %249 = vmatmul.f32.gmra.mxu0 %v111
    %v250 = vpop.f32.mrf.mxu0
    %v251 = vadd.f32 %v99, %v250
    %252 = vdwg.mxu0
    %253 = vmatpush.msra.mxu0 0.0
    %254 = vmatpush.msra.mxu0 0.0
    %255 = vmatpush.msra.mxu0 0.0
    %256 = vmatpush.msra.mxu0 0.0
    %257 = vmatpush.msra.mxu0 0.0
    %258 = vmatpush.msra.mxu0 0.0
    %259 = vmatpush.msra.mxu0 0.0
    %260 = vmatpush.msra.mxu0 0.0
    %261 = vmatpush.msra.mxu0 0.0
    %262 = vmatpush.msra.mxu0 0.0
    %263 = vmatpush.msra.mxu0 0.0
    %264 = vmatpush.msra.mxu0 0.0
    %265 = vmatpush.msra.mxu0 %v90
    %266 = vmatpush.msra.mxu0 %v82
    %267 = vmatpush.msra.mxu0 %v74
    %268 = vmatpush.msra.mxu0 %v66
    %269 = vmatmul.f32.gmra.mxu0 %v111
    %v270 = vpop.f32.mrf.mxu0
    %v271 = vadd.f32 %v100, %v270
    %272 = vdwg.mxu0
    %273 = vst [vmem:[#allocation8] sm:$0xff] %v131
    %274 = vst [vmem:[#allocation8 + $0x8] sm:$0xff] %v151
    %275 = vst [vmem:[#allocation8 + $0x10] sm:$0xff] %v171
    %276 = vst [vmem:[#allocation8 + $0x18] sm:$0xff] %v191
    %277 = vst [vmem:[#allocation8 + $0x20] sm:$0xff] %v211
    %278 = vst [vmem:[#allocation8 + $0x28] sm:$0xff] %v231
    %279 = vst [vmem:[#allocation8 + $0x30] sm:$0xff] %v251
    %280 = vst [vmem:[#allocation8 + $0x38] sm:$0xff] %v271
    // Predicated region
    $region26: #{tpu_custom_call.1} parent=1 // pred_check
      _
    $region27: #{tpu_custom_call.1} parent=1 // pred_check_branch
      %282 = sbr.rel (0) target = $region29
    $region28: #{tpu_custom_call.1} parent=1 // pred_region
      %284 = vsyncadd [#allocation4], 0
      %s286 = sshll.u32 [#allocation8], 4
      %s287 = int_to_ptr.vmem [resolvable:$true] %s286
      %s288 = sshll.u32 %s3, 4
      %s289 = int_to_ptr.hbm [resolvable:$true] %s288
      %291 = dma.vmem_to_hbm [thread:$0]  %s287, 1024, %s289, [#allocation4]
    $region29: #{tpu_custom_call.1} parent=1 // pred_fallthru
      _
    // Predicated region
    $region30: #{tpu_custom_call.1} parent=1 // pred_check
      _
    $region31: #{tpu_custom_call.1} parent=1 // pred_check_branch
      %293 = sbr.rel (0) target = $region33
    $region32: #{tpu_custom_call.1} parent=1 // pred_region
      %295 = dma.done [#allocation4], 1024
    $region33: #{tpu_custom_call.1} parent=1 // pred_fallthru
      _
    %296 = vsyncpa [#allocation3], 1
    %297 = vsyncpa [#allocation6], 1
    %298 = vsyncpa [#allocation4], 1

</llo_original>
